<compile_context>
chip_gen: v6e
topology: v6e:2x2x1
jax: 0.10.0
libtpu: 0.0.40
codegen_flags: <defaults>
</compile_context>

<pallas_src>
import jax
import jax.numpy as jnp
from jax import lax
from jax.experimental import pallas as pl
from jax.experimental.pallas import tpu as pltpu


def _center_loss_kernel(tgt_ref,       # (TB, 1)  int32 VMEM: targets for this tile
                        emb_ref,       # (TB, D)  VMEM: embedding tile
                        centers_ref,   # (C, D)   VMEM: full centers table (resident)
                        out_ref):      # (8, 128) VMEM: lane-dense partial sums
    tb, D = emb_ref.shape
    C = centers_ref.shape[0]

    # --- Gather via one-hot matmul on the (otherwise idle) MXU ---------------
    tgt = tgt_ref[...]                                                 # (TB, 1)
    onehot = (lax.broadcasted_iota(jnp.int32, (tb, C), 1) == tgt)
    onehot = onehot.astype(centers_ref.dtype)                          # (TB, C)
    gathered = jnp.dot(onehot, centers_ref[...],
                       preferred_element_type=jnp.float32)             # (TB, D) f32

    # --- Squared-difference, keep everything in vregs ------------------------
    d = emb_ref[...].astype(jnp.float32) - gathered
    d2 = d * d                                                         # (TB, D)

    # Fold lanes D -> 128 with static lane-aligned slices (pure VPU adds).
    folded = d2[:, 0:128]
    for k in range(1, D // 128):
        folded = folded + d2[:, k * 128:(k + 1) * 128]                 # (TB, 128)

    # Fold sublanes TB -> 8 with static sublane-aligned slices (pure VPU adds).
    part = folded[0:8, :]
    for r in range(1, tb // 8):
        part = part + folded[r * 8:(r + 1) * 8, :]                     # (8, 128)

    # Lane-dense, unmasked store of this tile's partial sums.
    out_ref[...] = part


def center_loss(embedding, target, centers, lamda, *, tile_b=None):
    """Pallas CenterLoss forward. Returns a scalar float32 loss."""
    B, D = embedding.shape
    C, Dc = centers.shape
    assert D == Dc, "embedding_dim mismatch"
    assert D % 128 == 0, "embedding_dim must be a multiple of 128 (lane width)"

    if tile_b is None:
        tile_b = B if B <= 512 else 512            # large tiles: amortize per-step cost
    assert B % tile_b == 0, "batch must be divisible by tile_b"
    assert tile_b % 8 == 0, "tile_b must be a multiple of 8 (sublanes)"

    num_tiles = B // tile_b
    target_2d = target.astype(jnp.int32).reshape(B, 1)

    partials = pl.pallas_call(
        _center_loss_kernel,
        out_shape=jax.ShapeDtypeStruct((num_tiles * 8, 128), jnp.float32),
        grid_spec=pltpu.PrefetchScalarGridSpec(
            num_scalar_prefetch=0,
            grid=(num_tiles,),
            in_specs=[
                pl.BlockSpec((tile_b, 1), lambda i: (i, 0)),   # targets (per tile)
                pl.BlockSpec((tile_b, D), lambda i: (i, 0)),   # embedding tile
                pl.BlockSpec((C, D), lambda i: (0, 0)),        # full centers, resident
            ],
            out_specs=pl.BlockSpec((8, 128), lambda i: (i, 0)),
        ),
        compiler_params=pltpu.CompilerParams(
            # Independent per-tile partials -> fully parallel grid axis
            # (shards across the two TensorCores on v7x / megacore).
            dimension_semantics=("parallel",)),
    )(target_2d, embedding, centers)

    # Tiny epilogue in plain JAX: global reduce, sqrt, and scaling.
    dist = jnp.sqrt(jnp.sum(partials))
    return (lamda * 0.5) * dist / B


if __name__ == "__main__":
    classes = 8
    embedding_dim = 128
    batch = 16
    lamda = 0.5

    key = jax.random.PRNGKey(0)
    k_centers, k_emb, k_tgt = jax.random.split(key, 3)

    # Deterministic "parameter" init, mirroring nn.Parameter(torch.randn(C, D)).
    centers = jax.random.normal(k_centers, (classes, embedding_dim), jnp.float32)
    embedding = jax.random.normal(k_emb, (batch, embedding_dim), jnp.float32)
    target = jax.random.randint(k_tgt, (batch,), 0, classes, dtype=jnp.int32)

    loss = center_loss(embedding, target, centers, lamda)
    loss = jax.block_until_ready(loss)

    # Pure-JAX reference for correctness check.
    expanded = centers[target]
    dist = jnp.sqrt(jnp.sum((embedding - expanded) ** 2))
    ref = lamda * 0.5 * dist / batch

    assert jnp.allclose(loss, ref, rtol=1e-5, atol=1e-5), (loss, ref)
    print("KERNEL_OK")
</pallas_src>

<mosaic_0001>
module attributes {stable_mosaic.version = 11 : i64} {
  func.func @_center_loss_kernel(%arg0: i32, %arg1: memref<16x1xi32, #tpu.memory_space<vmem>>, %arg2: memref<16x128xf32, #tpu.memory_space<vmem>>, %arg3: memref<8x128xf32, #tpu.memory_space<vmem>>, %arg4: memref<8x128xf32, #tpu.memory_space<vmem>>) attributes {dimension_semantics = [#tpu.dimension_semantics<parallel>], iteration_bounds = array<i64: 1>, scalar_prefetch = 0 : i64, scratch_operands = 0 : i64, tpu.core_type = #tpu.core_type<tc>, window_params = [{transform_indices = @transform_0, window_bounds = array<i64: 16, 1>}, {transform_indices = @transform_1, window_bounds = array<i64: 16, 128>}, {pipeline_mode = #tpu.pipeline_mode<synchronous>, transform_indices = @transform_2, window_bounds = array<i64: 8, 128>}, {transform_indices = @transform_3, window_bounds = array<i64: 8, 128>}]} {
    %c0 = arith.constant 0 : index
    %c0_0 = arith.constant 0 : index
    %0 = vector.load %arg1[%c0, %c0_0] : memref<16x1xi32, #tpu.memory_space<vmem>>, vector<16x1xi32>
    %1 = tpu.iota {dimensions = array<i32: 1>} : vector<16x8xi32>
    %2 = vector.broadcast %0 : vector<16x1xi32> to vector<16x8xi32>
    %3 = arith.cmpi eq, %1, %2 : vector<16x8xi32>
    %4 = arith.extui %3 : vector<16x8xi1> to vector<16x8xi32>
    %5 = arith.sitofp %4 : vector<16x8xi32> to vector<16x8xf32>
    %c0_1 = arith.constant 0 : index
    %c0_2 = arith.constant 0 : index
    %6 = vector.load %arg3[%c0_1, %c0_2] : memref<8x128xf32, #tpu.memory_space<vmem>>, vector<8x128xf32>
    %cst = arith.constant dense<0.000000e+00> : vector<16x128xf32>
    %7 = tpu.matmul %5, %6, %cst {dimension_numbers = #tpu.dot_dimension_numbers<[1], [0], [0], [1], [0, 0, 1, 1], [], []>} : vector<16x8xf32>, vector<8x128xf32>, vector<16x128xf32> -> vector<16x128xf32>
    %c0_3 = arith.constant 0 : index
    %c0_4 = arith.constant 0 : index
    %8 = vector.load %arg2[%c0_3, %c0_4] : memref<16x128xf32, #tpu.memory_space<vmem>>, vector<16x128xf32>
    %9 = arith.subf %8, %7 : vector<16x128xf32>
    %10 = arith.mulf %9, %9 : vector<16x128xf32>
    %11 = vector.extract_strided_slice %10 {offsets = [0, 0], sizes = [8, 128], strides = [1, 1]} : vector<16x128xf32> to vector<8x128xf32>
    %12 = vector.extract_strided_slice %10 {offsets = [8, 0], sizes = [8, 128], strides = [1, 1]} : vector<16x128xf32> to vector<8x128xf32>
    %13 = arith.addf %11, %12 : vector<8x128xf32>
    %c0_5 = arith.constant 0 : index
    %c0_6 = arith.constant 0 : index
    %14 = vector.load %arg4[%c0_5, %c0_6] : memref<8x128xf32, #tpu.memory_space<vmem>>, vector<8x128xf32>
    tpu.vector_store %arg4[%c0_5, %c0_6], %13 {strides = array<i32>} : memref<8x128xf32, #tpu.memory_space<vmem>>, vector<8x128xf32>,
    return
  }
  func.func @transform_0(%arg0: i32) -> (i32, i32) {
    %c0_i32 = arith.constant 0 : i32
    %c0_i32_0 = arith.constant 0 : i32
    return %arg0, %c0_i32 : i32, i32
  }
  func.func @transform_1(%arg0: i32) -> (i32, i32) {
    %c0_i32 = arith.constant 0 : i32
    %c0_i32_0 = arith.constant 0 : i32
    return %arg0, %c0_i32 : i32, i32
  }
  func.func @transform_2(%arg0: i32) -> (i32, i32) {
    %c0_i32 = arith.constant 0 : i32
    %c0_i32_0 = arith.constant 0 : i32
    %c0_i32_1 = arith.constant 0 : i32
    return %c0_i32, %c0_i32_0 : i32, i32
  }
  func.func @transform_3(%arg0: i32) -> (i32, i32) {
    %c0_i32 = arith.constant 0 : i32
    %c0_i32_0 = arith.constant 0 : i32
    return %arg0, %c0_i32 : i32, i32
  }
}

</mosaic_0001>

<llo_original>
// kernel: tpu_custom_call.1
$region0: #{tpu_custom_call.1}
  #allocation0 [shape = 'u32[]', space=smem, size = 0x4, offset = 0x4, fixed_abs, tag = 'smem constant byte address 0x4 - core index']
  #allocation1 [shape = 'u32[144,128]{1,0:T(1,128)}', space=vmem, size = 0x12000, scoped, tag = 'internal scratch']
  %s0 = inlined_call_operand.vmem [shape: s32[16,1], index: 0, kind: input, shape index: {}]
  %s1 = inlined_call_operand.vmem [shape: f32[16,128], index: 1, kind: input, shape index: {}]
  %s2 = inlined_call_operand.hbm [shape: f32[8,128], index: 2, kind: input, shape index: {}]
  %s3 = inlined_call_operand.hbm [shape: f32[8,128], index: 3, kind: output, shape index: {}]
  %s4 = sld [smem:[#allocation0]]
  $region26: #{tpu_custom_call.1} parent=0
    _
  %s6 = ssub.s32 1, %s4
  %s7 = scalar_select 0, %s6, %s4
  $region1: #{tpu_custom_call.1} parent=0
    #allocation2 [shape = 'u8[4096]{0}', space=vmem, size = 0x1000, scoped, tag = 'input window, operand 2, single buffered']
    #allocation3 [shape = 's32[1]{0}', space=sflag, size = 0x4, scoped, tag = 'scoped memory for tpu_custom_call.1']
    #allocation4 [shape = 's32[1]{0}', space=sflag, size = 0x4, scoped, tag = 'scoped memory for tpu_custom_call.1']
    #allocation5 [shape = 'u8[4096]{0}', space=vmem, size = 0x1000, scoped, tag = 'output window, operand 0, single buffered']
    %8 = vsyncpa [#allocation3], 0
    %9 = vsyncpa [#allocation4], 0
    // Predicated region
    $region2: #{tpu_custom_call.1} parent=1 // pred_check
      _
    $region3: #{tpu_custom_call.1} parent=1 // pred_check_branch
      %11 = sbr.rel (0) target = $region5
    $region4: #{tpu_custom_call.1} parent=1 // pred_region
      _
    $region5: #{tpu_custom_call.1} parent=1 // pred_fallthru
      _
    // Predicated region
    $region6: #{tpu_custom_call.1} parent=1 // pred_check
      _
    $region7: #{tpu_custom_call.1} parent=1 // pred_check_branch
      %13 = sbr.rel (0) target = $region9
    $region8: #{tpu_custom_call.1} parent=1 // pred_region
      _
    $region9: #{tpu_custom_call.1} parent=1 // pred_fallthru
      _
    // Predicated region
    $region10: #{tpu_custom_call.1} parent=1 // pred_check
      _
    $region11: #{tpu_custom_call.1} parent=1 // pred_check_branch
      %15 = sbr.rel (0) target = $region13
    $region12: #{tpu_custom_call.1} parent=1 // pred_region
      %s17 = ssub.s32 128, 128
      %18 = vsyncadd [#allocation3], %s17
      %s20 = sshll.u32 [#allocation2], 4
      %s21 = int_to_ptr.vmem [resolvable:$true] %s20
      %23 = dma.hbm_to_vmem [thread:$0]  %s2, 128, %s21, [#allocation3]
    $region13: #{tpu_custom_call.1} parent=1 // pred_fallthru
      _
    // Predicated region
    $region14: #{tpu_custom_call.1} parent=1 // pred_check
      _
    $region15: #{tpu_custom_call.1} parent=1 // pred_check_branch
      %25 = sbr.rel (0) target = $region17
    $region16: #{tpu_custom_call.1} parent=1 // pred_region
      %26 = dma.done [#allocation3], 128
    $region17: #{tpu_custom_call.1} parent=1 // pred_fallthru
      _
    %v27 = vld [vmem:[%s0] sm:$0xff]
    %v28 = vld [vmem:[%s0 + $0x8] sm:$0xff]
    %v29 = vlaneseq
    %v30 = vand.u32 %v29, 127
    %31 = vset.pattern.permute.xlu0 0
    %32 = vperm.xlu0 %31, %v27
    %v33 = vpop.permute.xlu0 %32
    %34 = vset.pattern.permute.xlu0 0
    %35 = vperm.xlu0 %34, %v28
    %v36 = vpop.permute.xlu0 %35
    %vm37 = vcmp.eq.s32.totalorder %v30, %v33
    %vm38 = vcmp.eq.s32.totalorder %v30, %v36
    %v39 = vsel %vm37, 1, 0
    %v40 = vsel %vm38, 1, 0
    %v41 = vcvt.s32.f32 %v39
    %v42 = vcvt.s32.f32 %v40
    %v43 = vld [vmem:[#allocation2] sm:$0xff]
    %vm44 = vcmask 64512
    %v46 = vsel %vm44, %v41, 0
    %v49 = vsel %vm44, %v42, 0
    %51 = vmatprep.subr.mxu0 0.0
    %52 = vmatpush1.msra.mxu0 0.0
    %53 = vmatprep.subr.mxu0 0.0
    %54 = vmatpush1.msra.mxu0 0.0
    %55 = vmatprep.subr.mxu0 0.0
    %56 = vmatpush1.msra.mxu0 0.0
    %57 = vmatprep.subr.mxu0 0.0
    %58 = vmatpush1.msra.mxu0 0.0
    %59 = vmatprep.subr.mxu0 0.0
    %60 = vmatpush1.msra.mxu0 0.0
    %61 = vmatprep.subr.mxu0 0.0
    %62 = vmatpush1.msra.mxu0 0.0
    %63 = vmatprep.subr.mxu0 0.0
    %64 = vmatpush1.msra.mxu0 0.0
    %65 = vmatprep.subr.mxu0 0.0
    %66 = vmatpush1.msra.mxu0 0.0
    %67 = vmatprep.subr.mxu0 0.0
    %68 = vmatpush1.msra.mxu0 0.0
    %69 = vmatprep.subr.mxu0 0.0
    %70 = vmatpush1.msra.mxu0 0.0
    %71 = vmatprep.subr.mxu0 0.0
    %72 = vmatpush1.msra.mxu0 0.0
    %73 = vmatprep.subr.mxu0 0.0
    %74 = vmatpush1.msra.mxu0 0.0
    %75 = vmatprep.subr.mxu0 0.0
    %76 = vmatpush1.msra.mxu0 0.0
    %77 = vmatprep.subr.mxu0 0.0
    %78 = vmatpush1.msra.mxu0 0.0
    %79 = vmatprep.subr.mxu0 0.0
    %80 = vmatpush1.msra.mxu0 0.0
    %81 = vmatprep.subr.mxu0 0.0
    %82 = vmatpush1.msra.mxu0 %v43
    %83 = vmatprep.subr.mxu0 0.0
    %84 = vmatpush2.msra.mxu0 0.0
    %85 = vmatprep.subr.mxu0 0.0
    %86 = vmatpush2.msra.mxu0 0.0
    %87 = vmatprep.subr.mxu0 0.0
    %88 = vmatpush2.msra.mxu0 0.0
    %89 = vmatprep.subr.mxu0 0.0
    %90 = vmatpush2.msra.mxu0 0.0
    %91 = vmatprep.subr.mxu0 0.0
    %92 = vmatpush2.msra.mxu0 0.0
    %93 = vmatprep.subr.mxu0 0.0
    %94 = vmatpush2.msra.mxu0 0.0
    %95 = vmatprep.subr.mxu0 0.0
    %96 = vmatpush2.msra.mxu0 0.0
    %97 = vmatprep.subr.mxu0 0.0
    %98 = vmatpush2.msra.mxu0 0.0
    %99 = vmatprep.subr.mxu0 0.0
    %100 = vmatpush2.msra.mxu0 0.0
    %101 = vmatprep.subr.mxu0 0.0
    %102 = vmatpush2.msra.mxu0 0.0
    %103 = vmatprep.subr.mxu0 0.0
    %104 = vmatpush2.msra.mxu0 0.0
    %105 = vmatprep.subr.mxu0 0.0
    %106 = vmatpush2.msra.mxu0 0.0
    %107 = vmatprep.subr.mxu0 0.0
    %108 = vmatpush2.msra.mxu0 0.0
    %109 = vmatprep.subr.mxu0 0.0
    %110 = vmatpush2.msra.mxu0 0.0
    %111 = vmatprep.subr.mxu0 0.0
    %112 = vmatpush2.msra.mxu0 0.0
    %113 = vmatprep.subr.mxu0 0.0
    %114 = vmatpush2.msra.mxu0 0.0
    %115 = vmatprep.mubr.f32.mxu0 0.0
    %116 = vmatmul.mubr.f32.gmra.mxu0 %v46
    %v117 = vpop.f32.mrf.mxu0
    %v118 = vadd.f32 0.0, %v117
    %v119 = vpop.f32.mrf.mxu0
    %120 = vmatprep.mubr.f32.mxu0 0.0
    %121 = vmatmul.mubr.f32.gmra.mxu0 %v49
    %v122 = vpop.f32.mrf.mxu0
    %v123 = vadd.f32 0.0, %v122
    %v124 = vpop.f32.mrf.mxu0
    %125 = vdwg.mxu0
    %v126 = vld [vmem:[%s1] sm:$0xff]
    %v127 = vld [vmem:[%s1 + $0x8] sm:$0xff]
    %v128 = vsub.f32 %v126, %v118
    %v129 = vsub.f32 %v127, %v123
    %v130 = vmul.f32 %v128, %v128
    %v131 = vmul.f32 %v129, %v129
    %v132 = vadd.f32 %v130, %v131
    %133 = vst [vmem:[#allocation5] sm:$0xff] %v132
    // Predicated region
    $region18: #{tpu_custom_call.1} parent=1 // pred_check
      _
    $region19: #{tpu_custom_call.1} parent=1 // pred_check_branch
      %135 = sbr.rel (0) target = $region21
    $region20: #{tpu_custom_call.1} parent=1 // pred_region
      %s137 = ssub.s32 128, 128
      %138 = vsyncadd [#allocation4], %s137
      %s140 = sshll.u32 [#allocation5], 4
      %s141 = int_to_ptr.vmem [resolvable:$true] %s140
      %143 = dma.vmem_to_hbm [thread:$0]  %s141, 128, %s3, [#allocation4]
    $region21: #{tpu_custom_call.1} parent=1 // pred_fallthru
      _
    // Predicated region
    $region22: #{tpu_custom_call.1} parent=1 // pred_check
      _
    $region23: #{tpu_custom_call.1} parent=1 // pred_check_branch
      %145 = sbr.rel (0) target = $region25
    $region24: #{tpu_custom_call.1} parent=1 // pred_region
      %146 = dma.done [#allocation4], 128
    $region25: #{tpu_custom_call.1} parent=1 // pred_fallthru
      _
    %147 = vsyncpa [#allocation3], 1
    %148 = vsyncpa [#allocation4], 1

</llo_original>
